<compile_context>
chip_gen: v6e
topology: v6e:2x2x1
jax: 0.10.0
libtpu: 0.0.40
codegen_flags: <defaults>
</compile_context>

<pallas_src>
import functools

import jax
import jax.numpy as jnp
from jax.experimental import pallas as pl
from jax.experimental.pallas import tpu as pltpu

LANE = 128          # vreg lane width
SUBLANE_BF16 = 16   # bf16 sublane packing


def _round_up(x, m):
    return -(-x // m) * m


def _pad2(a, rows, cols):
    pr, pc = rows - a.shape[0], cols - a.shape[1]
    if pr or pc:
        a = jnp.pad(a, ((0, pr), (0, pc)))
    return a


# ----------------------------------------------------------------------------- kernel
def _mlp_kernel(x_ref, *refs, relu_flags):
    """Fused stack of Linear[+ReLU] layers over one row tile.

    refs = [w0, b0, w1, b1, ..., out_ref]
      x_ref : (TM, F0)        bf16   (lane-padded)
      w_i   : (F_i, F_{i+1})  bf16   (lane-padded, VMEM-resident, constant index)
      b_i   : (1, F_{i+1})    f32
      out   : (TM, F_last)    f32
    Dropout is identity (eval mode).
    """
    out_ref = refs[-1]
    w_refs = refs[:-1]

    h = x_ref[...]                                     # bf16 (TM, F0)
    n = len(relu_flags)
    # TODO(synk): for deep stacks of equal-shape hidden->hidden layers, pack weights
    # into one (n_layers, H, H) array and iterate with lax.fori_loop to bound live
    # ranges; static unroll is fine for small n_layers.
    for li in range(n):
        w = w_refs[2 * li][...]                        # bf16 (F_i, F_{i+1})
        b = w_refs[2 * li + 1][...]                    # f32  (1, F_{i+1})
        acc = jnp.dot(h, w, preferred_element_type=jnp.float32) + b
        if relu_flags[li]:
            acc = jnp.maximum(acc, 0.0)                # ReLU
        # Keep inter-layer activations bf16 (MXU-native); final layer stays f32.
        h = acc if li == n - 1 else acc.astype(jnp.bfloat16)
    out_ref[...] = h.astype(out_ref.dtype)


# ----------------------------------------------------------------------------- one fused pallas_call
def _fused_stack(x2, layers, *, row_tile):
    """Run a list of layers [(w, b, apply_relu), ...] fused in one pallas_call.

    x2: (m, f_in) float32. Returns (m, f_out) float32.
    """
    m, f_in = x2.shape
    f_in_pad = _round_up(f_in, LANE)

    weight_args = []
    relu_flags = []
    fi_pad = f_in_pad
    max_fo_pad = f_in_pad
    for (w, b, relu) in layers:
        fo = w.shape[1]
        fo_pad = _round_up(fo, LANE)
        max_fo_pad = max(max_fo_pad, fo_pad)
        weight_args.append(_pad2(w.astype(jnp.bfloat16), fi_pad, fo_pad))
        weight_args.append(_pad2(b.reshape(1, -1).astype(jnp.float32), 1, fo_pad))
        relu_flags.append(bool(relu))
        fi_pad = fo_pad
    f_out = layers[-1][0].shape[1]
    f_out_pad = fi_pad

    # Row tile: multiple of 16 (bf16 sublane pack); cap at ceil(m/2) so there are
    # >=2 grid steps for v7x's two TensorCores whenever the batch allows it.
    tm = min(row_tile, max(SUBLANE_BF16, _round_up(-(-m // 2), SUBLANE_BF16)))
    m_pad = _round_up(m, tm)

    x_p = x2.astype(jnp.bfloat16)
    if m_pad != m or f_in_pad != f_in:
        x_p = jnp.pad(x_p, ((0, m_pad - m), (0, f_in_pad - f_in)))

    grid = (m_pad // tm,)
    in_specs = [pl.BlockSpec((tm, f_in_pad), lambda i: (i, 0))]
    # Weights/biases: full-array blocks, constant index -> fetched once, VMEM-resident.
    in_specs += [pl.BlockSpec(a.shape, lambda i: (0, 0)) for a in weight_args]
    out_spec = pl.BlockSpec((tm, f_out_pad), lambda i: (i, 0))

    # Explicit VMEM budget: double-buffered weights + x/out tiles + activation temps.
    w_bytes = sum(int(a.size) * a.dtype.itemsize for a in weight_args)
    act_bytes = tm * max_fo_pad * 4
    vmem_limit = 2 * (w_bytes + tm * f_in_pad * 2 + tm * f_out_pad * 4) + 4 * act_bytes
    vmem_limit = int(min(max(vmem_limit + (4 << 20), 32 << 20), 56 << 20))

    kern = functools.partial(_mlp_kernel, relu_flags=tuple(relu_flags))
    out = pl.pallas_call(
        kern,
        out_shape=jax.ShapeDtypeStruct((m_pad, f_out_pad), jnp.float32),
        grid=grid,
        in_specs=in_specs,
        out_specs=out_spec,
        compiler_params=pltpu.CompilerParams(
            dimension_semantics=("parallel",),   # lets v7x split row tiles across TCs
            vmem_limit_bytes=vmem_limit,
        ),
    )(x_p, *weight_args)

    return out[:m, :f_out]


# ----------------------------------------------------------------------------- wrapper
def mlp_forward(params, x, *, row_tile=512, vmem_weight_budget=24 * 1024 * 1024):
    """params = {"dense": [(w, b), ...], "readout": (w, b) or None}

    x: (..., F_in) -> (..., F_out). Leading dims are flattened into the row axis.
    Runs one fused pallas_call when the (padded, double-buffered) bf16 weight stack
    fits `vmem_weight_budget`; otherwise falls back to per-layer pallas_calls.
    """
    dense = params["dense"]
    readout = params["readout"]

    layers = [(w, b, True) for (w, b) in dense]
    if readout is not None:
        layers.append((readout[0], readout[1], False))

    lead_shape = x.shape[:-1]
    f_in = x.shape[-1]
    m = 1
    for s in lead_shape:
        m *= s
    x2 = x.reshape(m, f_in).astype(jnp.float32)

    # Padded bf16 weight bytes, doubled for the pipeline's double-buffering.
    def _padded_w_bytes(w):
        fi, fo = w.shape
        return _round_up(fi, LANE) * _round_up(fo, LANE) * 2

    total_w_bytes = 2 * sum(_padded_w_bytes(w) for (w, _, _) in layers)

    if total_w_bytes <= vmem_weight_budget:
        out = _fused_stack(x2, layers, row_tile=row_tile)
    else:
        # Fallback: weights too big to keep the whole stack VMEM-resident; run one
        # layer per pallas_call (activations round-trip HBM between layers).
        # TODO(synk): a K-tiled reduction-grid variant would avoid the HBM round trips.
        h = x2
        for layer in layers:
            h = _fused_stack(h, [layer], row_tile=row_tile)
        out = h

    f_out = layers[-1][0].shape[1]
    return out.reshape(*lead_shape, f_out)


# ----------------------------------------------------------------------------- reference / params
def mlp_reference(params, x):
    h = x.astype(jnp.float32)
    for (w, b) in params["dense"]:
        h = jnp.maximum(jnp.dot(h, w) + b, 0.0)
    if params["readout"] is not None:
        w, b = params["readout"]
        h = jnp.dot(h, w) + b
    return h


def init_params(key, input_size, hidden_size, output_size, n_layers):
    keys = iter(jax.random.split(key, 2 * (n_layers + 1)))

    def lin(fan_in, fan_out):
        w = 0.1 * jax.random.normal(next(keys), (fan_in, fan_out), jnp.float32)
        b = 0.1 * jax.random.normal(next(keys), (fan_out,), jnp.float32)
        return w, b

    dense = []
    for i in range(n_layers):
        dense.append(lin(input_size if i == 0 else hidden_size, hidden_size))
    readout = lin(hidden_size, output_size) if output_size is not None else None
    return {"dense": dense, "readout": readout}


# ----------------------------------------------------------------------------- main
if __name__ == "__main__":
    # Small shapes consistent with the module: batch=2, seq=8, input=16, hidden=32, out=4.
    B, L, F_IN = 2, 8, 16
    HIDDEN, OUT, N_LAYERS = 32, 4, 2

    root = jax.random.PRNGKey(0)
    kp, kx = jax.random.split(root)
    params = init_params(kp, F_IN, HIDDEN, OUT, N_LAYERS)
    x = jax.random.normal(kx, (B, L, F_IN), jnp.float32)

    # Fused path.
    y = mlp_forward(params, x)
    jax.block_until_ready(y)
    y_ref = mlp_reference(params, x)
    assert y.shape == (B, L, OUT), y.shape
    # bf16 operands / f32 accumulation vs f32 reference -> loosened tolerance.
    assert jnp.allclose(y, y_ref, atol=3e-2, rtol=3e-2), float(jnp.max(jnp.abs(y - y_ref)))

    # "No readout" configuration (output_size=None).
    params_nr = {"dense": params["dense"], "readout": None}
    y2 = mlp_forward(params_nr, x)
    jax.block_until_ready(y2)
    y2_ref = mlp_reference(params_nr, x)
    assert y2.shape == (B, L, HIDDEN), y2.shape
    assert jnp.allclose(y2, y2_ref, atol=3e-2, rtol=3e-2)

    # Exercise the per-layer VMEM-overflow fallback path explicitly.
    y3 = mlp_forward(params, x, vmem_weight_budget=0)
    jax.block_until_ready(y3)
    assert jnp.allclose(y3, y_ref, atol=3e-2, rtol=3e-2)

    print("KERNEL_OK")
</pallas_src>

<mosaic_0001>
module attributes {stable_mosaic.version = 11 : i64} {
  func.func @_mlp_kernel(%arg0: i32, %arg1: memref<16x128xbf16, #tpu.memory_space<vmem>>, %arg2: memref<128x128xbf16, #tpu.memory_space<vmem>>, %arg3: memref<1x128xf32, #tpu.memory_space<vmem>>, %arg4: memref<128x128xbf16, #tpu.memory_space<vmem>>, %arg5: memref<1x128xf32, #tpu.memory_space<vmem>>, %arg6: memref<128x128xbf16, #tpu.memory_space<vmem>>, %arg7: memref<1x128xf32, #tpu.memory_space<vmem>>, %arg8: memref<16x128xf32, #tpu.memory_space<vmem>>) attributes {dimension_semantics = [#tpu.dimension_semantics<parallel>], iteration_bounds = array<i64: 1>, scalar_prefetch = 0 : i64, scratch_operands = 0 : i64, tpu.core_type = #tpu.core_type<tc>, window_params = [{transform_indices = @transform_0, window_bounds = array<i64: 16, 128>}, {pipeline_mode = #tpu.pipeline_mode<synchronous>, transform_indices = @transform_1, window_bounds = array<i64: 128, 128>}, {pipeline_mode = #tpu.pipeline_mode<synchronous>, transform_indices = @transform_2, window_bounds = array<i64: 1, 128>}, {pipeline_mode = #tpu.pipeline_mode<synchronous>, transform_indices = @transform_3, window_bounds = array<i64: 128, 128>}, {pipeline_mode = #tpu.pipeline_mode<synchronous>, transform_indices = @transform_4, window_bounds = array<i64: 1, 128>}, {pipeline_mode = #tpu.pipeline_mode<synchronous>, transform_indices = @transform_5, window_bounds = array<i64: 128, 128>}, {pipeline_mode = #tpu.pipeline_mode<synchronous>, transform_indices = @transform_6, window_bounds = array<i64: 1, 128>}, {transform_indices = @transform_7, window_bounds = array<i64: 16, 128>}]} {
    %c0 = arith.constant 0 : index
    %c0_0 = arith.constant 0 : index
    %0 = vector.load %arg1[%c0, %c0_0] : memref<16x128xbf16, #tpu.memory_space<vmem>>, vector<16x128xbf16>
    %c0_1 = arith.constant 0 : index
    %c0_2 = arith.constant 0 : index
    %1 = vector.load %arg2[%c0_1, %c0_2] : memref<128x128xbf16, #tpu.memory_space<vmem>>, vector<128x128xbf16>
    %c0_3 = arith.constant 0 : index
    %c0_4 = arith.constant 0 : index
    %2 = vector.load %arg3[%c0_3, %c0_4] : memref<1x128xf32, #tpu.memory_space<vmem>>, vector<1x128xf32>
    %cst = arith.constant dense<0.000000e+00> : vector<16x128xf32>
    %3 = tpu.matmul %0, %1, %cst {dimension_numbers = #tpu.dot_dimension_numbers<[1], [0], [0], [1], [0, 0, 1, 1], [], []>} : vector<16x128xbf16>, vector<128x128xbf16>, vector<16x128xf32> -> vector<16x128xf32>
    %4 = vector.broadcast %2 : vector<1x128xf32> to vector<16x128xf32>
    %5 = arith.addf %3, %4 : vector<16x128xf32>
    %cst_5 = arith.constant 0.000000e+00 : f32
    %6 = vector.broadcast %cst_5 : f32 to vector<16x128xf32>
    %7 = arith.maximumf %5, %6 : vector<16x128xf32>
    %8 = arith.truncf %7 : vector<16x128xf32> to vector<16x128xbf16>
    %c0_6 = arith.constant 0 : index
    %c0_7 = arith.constant 0 : index
    %9 = vector.load %arg4[%c0_6, %c0_7] : memref<128x128xbf16, #tpu.memory_space<vmem>>, vector<128x128xbf16>
    %c0_8 = arith.constant 0 : index
    %c0_9 = arith.constant 0 : index
    %10 = vector.load %arg5[%c0_8, %c0_9] : memref<1x128xf32, #tpu.memory_space<vmem>>, vector<1x128xf32>
    %cst_10 = arith.constant dense<0.000000e+00> : vector<16x128xf32>
    %11 = tpu.matmul %8, %9, %cst_10 {dimension_numbers = #tpu.dot_dimension_numbers<[1], [0], [0], [1], [0, 0, 1, 1], [], []>} : vector<16x128xbf16>, vector<128x128xbf16>, vector<16x128xf32> -> vector<16x128xf32>
    %12 = vector.broadcast %10 : vector<1x128xf32> to vector<16x128xf32>
    %13 = arith.addf %11, %12 : vector<16x128xf32>
    %cst_11 = arith.constant 0.000000e+00 : f32
    %14 = vector.broadcast %cst_11 : f32 to vector<16x128xf32>
    %15 = arith.maximumf %13, %14 : vector<16x128xf32>
    %16 = arith.truncf %15 : vector<16x128xf32> to vector<16x128xbf16>
    %c0_12 = arith.constant 0 : index
    %c0_13 = arith.constant 0 : index
    %17 = vector.load %arg6[%c0_12, %c0_13] : memref<128x128xbf16, #tpu.memory_space<vmem>>, vector<128x128xbf16>
    %c0_14 = arith.constant 0 : index
    %c0_15 = arith.constant 0 : index
    %18 = vector.load %arg7[%c0_14, %c0_15] : memref<1x128xf32, #tpu.memory_space<vmem>>, vector<1x128xf32>
    %cst_16 = arith.constant dense<0.000000e+00> : vector<16x128xf32>
    %19 = tpu.matmul %16, %17, %cst_16 {dimension_numbers = #tpu.dot_dimension_numbers<[1], [0], [0], [1], [0, 0, 1, 1], [], []>} : vector<16x128xbf16>, vector<128x128xbf16>, vector<16x128xf32> -> vector<16x128xf32>
    %20 = vector.broadcast %18 : vector<1x128xf32> to vector<16x128xf32>
    %21 = arith.addf %19, %20 : vector<16x128xf32>
    %c0_17 = arith.constant 0 : index
    %c0_18 = arith.constant 0 : index
    %22 = vector.load %arg8[%c0_17, %c0_18] : memref<16x128xf32, #tpu.memory_space<vmem>>, vector<16x128xf32>
    tpu.vector_store %arg8[%c0_17, %c0_18], %21 {strides = array<i32>} : memref<16x128xf32, #tpu.memory_space<vmem>>, vector<16x128xf32>,
    return
  }
  func.func @transform_0(%arg0: i32) -> (i32, i32) {
    %c0_i32 = arith.constant 0 : i32
    %c0_i32_0 = arith.constant 0 : i32
    return %arg0, %c0_i32 : i32, i32
  }
  func.func @transform_1(%arg0: i32) -> (i32, i32) {
    %c0_i32 = arith.constant 0 : i32
    %c0_i32_0 = arith.constant 0 : i32
    %c0_i32_1 = arith.constant 0 : i32
    return %c0_i32, %c0_i32_0 : i32, i32
  }
  func.func @transform_2(%arg0: i32) -> (i32, i32) {
    %c0_i32 = arith.constant 0 : i32
    %c0_i32_0 = arith.constant 0 : i32
    %c0_i32_1 = arith.constant 0 : i32
    return %c0_i32, %c0_i32_0 : i32, i32
  }
  func.func @transform_3(%arg0: i32) -> (i32, i32) {
    %c0_i32 = arith.constant 0 : i32
    %c0_i32_0 = arith.constant 0 : i32
    %c0_i32_1 = arith.constant 0 : i32
    return %c0_i32, %c0_i32_0 : i32, i32
  }
  func.func @transform_4(%arg0: i32) -> (i32, i32) {
    %c0_i32 = arith.constant 0 : i32
    %c0_i32_0 = arith.constant 0 : i32
    %c0_i32_1 = arith.constant 0 : i32
    return %c0_i32, %c0_i32_0 : i32, i32
  }
  func.func @transform_5(%arg0: i32) -> (i32, i32) {
    %c0_i32 = arith.constant 0 : i32
    %c0_i32_0 = arith.constant 0 : i32
    %c0_i32_1 = arith.constant 0 : i32
    return %c0_i32, %c0_i32_0 : i32, i32
  }
  func.func @transform_6(%arg0: i32) -> (i32, i32) {
    %c0_i32 = arith.constant 0 : i32
    %c0_i32_0 = arith.constant 0 : i32
    %c0_i32_1 = arith.constant 0 : i32
    return %c0_i32, %c0_i32_0 : i32, i32
  }
  func.func @transform_7(%arg0: i32) -> (i32, i32) {
    %c0_i32 = arith.constant 0 : i32
    %c0_i32_0 = arith.constant 0 : i32
    return %arg0, %c0_i32 : i32, i32
  }
}

</mosaic_0001>

<llo_original>
// kernel: tpu_custom_call.1
$region0: #{tpu_custom_call.1}
  #allocation0 [shape = 'u32[]', space=smem, size = 0x4, offset = 0x4, fixed_abs, tag = 'smem constant byte address 0x4 - core index']
  #allocation1 [shape = 'u32[144,128]{1,0:T(1,128)}', space=vmem, size = 0x12000, scoped, tag = 'internal scratch']
  %s0 = inlined_call_operand.hbm [shape: bf16[16,128], index: 0, kind: input, shape index: {}]
  %s1 = inlined_call_operand.hbm [shape: bf16[128,128], index: 1, kind: input, shape index: {}]
  %s2 = inlined_call_operand.vmem [shape: f32[1,128], index: 2, kind: input, shape index: {}]
  %s3 = inlined_call_operand.hbm [shape: bf16[128,128], index: 3, kind: input, shape index: {}]
  %s4 = inlined_call_operand.vmem [shape: f32[1,128], index: 4, kind: input, shape index: {}]
  %s5 = inlined_call_operand.hbm [shape: bf16[128,128], index: 5, kind: input, shape index: {}]
  %s6 = inlined_call_operand.vmem [shape: f32[1,128], index: 6, kind: input, shape index: {}]
  %s7 = inlined_call_operand.hbm [shape: f32[16,128], index: 7, kind: output, shape index: {}]
  %s8 = sld [smem:[#allocation0]]
  $region54: #{tpu_custom_call.1} parent=0
    _
  %s10 = ssub.s32 1, %s8
  %s11 = scalar_select 0, %s10, %s8
  $region1: #{tpu_custom_call.1} parent=0
    #allocation2 [shape = 'u8[4096]{0}', space=vmem, size = 0x1000, scoped, tag = 'input window, operand 0, single buffered']
    #allocation3 [shape = 's32[1]{0}', space=sflag, size = 0x4, scoped, tag = 'scoped memory for tpu_custom_call.1']
    #allocation4 [shape = 's32[1]{0}', space=sflag, size = 0x4, scoped, tag = 'scoped memory for tpu_custom_call.1']
    #allocation5 [shape = 'u8[32768]{0}', space=vmem, size = 0x8000, scoped, tag = 'input window, operand 1, single buffered']
    #allocation6 [shape = 's32[1]{0}', space=sflag, size = 0x4, scoped, tag = 'scoped memory for tpu_custom_call.1']
    #allocation7 [shape = 'u8[32768]{0}', space=vmem, size = 0x8000, scoped, tag = 'input window, operand 3, single buffered']
    #allocation8 [shape = 'u8[32768]{0}', space=vmem, size = 0x8000, scoped, tag = 'input window, operand 5, single buffered']
    #allocation9 [shape = 's32[1]{0}', space=sflag, size = 0x4, scoped, tag = 'scoped memory for tpu_custom_call.1']
    #allocation10 [shape = 'u8[8192]{0}', space=vmem, size = 0x2000, scoped, tag = 'output window, operand 0, single buffered']
    %12 = vsyncpa [#allocation3], 0
    %13 = vsyncpa [#allocation6], 0
    %14 = vsyncpa [#allocation9], 0
    %15 = vsyncpa [#allocation4], 0
    // Predicated region
    $region2: #{tpu_custom_call.1} parent=1 // pred_check
      _
    $region3: #{tpu_custom_call.1} parent=1 // pred_check_branch
      %17 = sbr.rel (0) target = $region5
    $region4: #{tpu_custom_call.1} parent=1 // pred_region
      %s19 = ssub.s32 128, 128
      %20 = vsyncadd [#allocation3], %s19
      %s21 = sshll.u32 [#allocation2], 4
      %s22 = int_to_ptr.vmem [resolvable:$true] %s21
      %27 = dma.hbm_to_vmem [thread:$0]  %s0, 128, %s22, [#allocation3], 64, 64, 4
    $region5: #{tpu_custom_call.1} parent=1 // pred_fallthru
      _
    // Predicated region
    $region6: #{tpu_custom_call.1} parent=1 // pred_check
      _
    $region7: #{tpu_custom_call.1} parent=1 // pred_check_branch
      %29 = sbr.rel (0) target = $region9
    $region8: #{tpu_custom_call.1} parent=1 // pred_region
      %s31 = ssub.s32 1024, 1024
      %32 = vsyncadd [#allocation6], %s31
      %s33 = sshll.u32 [#allocation5], 4
      %s34 = int_to_ptr.vmem [resolvable:$true] %s33
      %39 = dma.hbm_to_vmem [thread:$0]  %s1, 1024, %s34, [#allocation6], 64, 64, 4
    $region9: #{tpu_custom_call.1} parent=1 // pred_fallthru
      _
    // Predicated region
    $region10: #{tpu_custom_call.1} parent=1 // pred_check
      _
    $region11: #{tpu_custom_call.1} parent=1 // pred_check_branch
      %41 = sbr.rel (0) target = $region13
    $region12: #{tpu_custom_call.1} parent=1 // pred_region
      _
    $region13: #{tpu_custom_call.1} parent=1 // pred_fallthru
      _
    // Predicated region
    $region14: #{tpu_custom_call.1} parent=1 // pred_check
      _
    $region15: #{tpu_custom_call.1} parent=1 // pred_check_branch
      %43 = sbr.rel (0) target = $region17
    $region16: #{tpu_custom_call.1} parent=1 // pred_region
      %s45 = ssub.s32 1024, 1024
      %46 = vsyncadd [#allocation6], %s45
      %s47 = sshll.u32 [#allocation7], 4
      %s48 = int_to_ptr.vmem [resolvable:$true] %s47
      %53 = dma.hbm_to_vmem [thread:$0]  %s3, 1024, %s48, [#allocation6], 64, 64, 4
    $region17: #{tpu_custom_call.1} parent=1 // pred_fallthru
      _
    // Predicated region
    $region18: #{tpu_custom_call.1} parent=1 // pred_check
      _
    $region19: #{tpu_custom_call.1} parent=1 // pred_check_branch
      %55 = sbr.rel (0) target = $region21
    $region20: #{tpu_custom_call.1} parent=1 // pred_region
      _
    $region21: #{tpu_custom_call.1} parent=1 // pred_fallthru
      _
    // Predicated region
    $region22: #{tpu_custom_call.1} parent=1 // pred_check
      _
    $region23: #{tpu_custom_call.1} parent=1 // pred_check_branch
      %57 = sbr.rel (0) target = $region25
    $region24: #{tpu_custom_call.1} parent=1 // pred_region
      %s59 = ssub.s32 1024, 1024
      %60 = vsyncadd [#allocation9], %s59
      %s61 = sshll.u32 [#allocation8], 4
      %s62 = int_to_ptr.vmem [resolvable:$true] %s61
      %67 = dma.hbm_to_vmem [thread:$0]  %s5, 1024, %s62, [#allocation9], 64, 64, 4
    $region25: #{tpu_custom_call.1} parent=1 // pred_fallthru
      _
    // Predicated region
    $region26: #{tpu_custom_call.1} parent=1 // pred_check
      _
    $region27: #{tpu_custom_call.1} parent=1 // pred_check_branch
      %69 = sbr.rel (0) target = $region29
    $region28: #{tpu_custom_call.1} parent=1 // pred_region
      _
    $region29: #{tpu_custom_call.1} parent=1 // pred_fallthru
      _
    // Predicated region
    $region30: #{tpu_custom_call.1} parent=1 // pred_check
      _
    $region31: #{tpu_custom_call.1} parent=1 // pred_check_branch
      %71 = sbr.rel (0) target = $region33
    $region32: #{tpu_custom_call.1} parent=1 // pred_region
      %72 = dma.done [#allocation3], 128
    $region33: #{tpu_custom_call.1} parent=1 // pred_fallthru
      _
    // Predicated region
    $region34: #{tpu_custom_call.1} parent=1 // pred_check
      _
    $region35: #{tpu_custom_call.1} parent=1 // pred_check_branch
      %74 = sbr.rel (0) target = $region37
    $region36: #{tpu_custom_call.1} parent=1 // pred_region
      %75 = dma.done [#allocation6], 1024
    $region37: #{tpu_custom_call.1} parent=1 // pred_fallthru
      _
    // Predicated region
    $region38: #{tpu_custom_call.1} parent=1 // pred_check
      _
    $region39: #{tpu_custom_call.1} parent=1 // pred_check_branch
      %77 = sbr.rel (0) target = $region41
    $region40: #{tpu_custom_call.1} parent=1 // pred_region
      %78 = dma.done [#allocation6], 1024
    $region41: #{tpu_custom_call.1} parent=1 // pred_fallthru
      _
    // Predicated region
    $region42: #{tpu_custom_call.1} parent=1 // pred_check
      _
    $region43: #{tpu_custom_call.1} parent=1 // pred_check_branch
      %80 = sbr.rel (0) target = $region45
    $region44: #{tpu_custom_call.1} parent=1 // pred_region
      %81 = dma.done [#allocation9], 1024
    $region45: #{tpu_custom_call.1} parent=1 // pred_fallthru
      _
    %v83 = vld [vmem:[#allocation2] sm:$0xf]
    %v84 = vld [vmem:[#allocation2 + $0x4] sm:$0xf]
    %v85 = vld [vmem:[#allocation5] sm:$0xf]
    %v86 = vld [vmem:[#allocation5 + $0x4] sm:$0xf]
    %v87 = vld [vmem:[#allocation5 + $0x8] sm:$0xf]
    %v88 = vld [vmem:[#allocation5 + $0xc] sm:$0xf]
    %v89 = vld [vmem:[#allocation5 + $0x10] sm:$0xf]
    %v90 = vld [vmem:[#allocation5 + $0x14] sm:$0xf]
    %v91 = vld [vmem:[#allocation5 + $0x18] sm:$0xf]
    %v92 = vld [vmem:[#allocation5 + $0x1c] sm:$0xf]
    %v93 = vld [vmem:[#allocation5 + $0x20] sm:$0xf]
    %v94 = vld [vmem:[#allocation5 + $0x24] sm:$0xf]
    %v95 = vld [vmem:[#allocation5 + $0x28] sm:$0xf]
    %v96 = vld [vmem:[#allocation5 + $0x2c] sm:$0xf]
    %v97 = vld [vmem:[#allocation5 + $0x30] sm:$0xf]
    %v98 = vld [vmem:[#allocation5 + $0x34] sm:$0xf]
    %v99 = vld [vmem:[#allocation5 + $0x38] sm:$0xf]
    %v100 = vld [vmem:[#allocation5 + $0x3c] sm:$0xf]
    %v101 = vld [vmem:[%s2] sm:$0x1]
    %v103 = vlaneseq
    %v104 = vshrl.u32 %v103, 7
    %v105 = vsub.s32 0, %v104
    %v106 = vrot.slane %v101, %v105
    %v110 = vunpack.c.l.b16 %v83
    %v111 = vunpack.c.l.b16 %v84
    %v112 = vpack.c.b16 %v111, %v110
    %v130 = vunpack.c.l.b16 %v85
    %v131 = vunpack.c.l.b16 %v86
    %v132 = vunpack.c.l.b16 %v87
    %v133 = vunpack.c.l.b16 %v88
    %v134 = vunpack.c.l.b16 %v89
    %v135 = vunpack.c.l.b16 %v90
    %v136 = vunpack.c.l.b16 %v91
    %v137 = vunpack.c.l.b16 %v92
    %v138 = vunpack.c.l.b16 %v93
    %v139 = vunpack.c.l.b16 %v94
    %v140 = vunpack.c.l.b16 %v95
    %v141 = vunpack.c.l.b16 %v96
    %v142 = vunpack.c.l.b16 %v97
    %v143 = vunpack.c.l.b16 %v98
    %v144 = vunpack.c.l.b16 %v99
    %v145 = vunpack.c.l.b16 %v100
    %v146 = vpack.c.b16 %v131, %v130
    %v147 = vpack.c.b16 %v133, %v132
    %v148 = vpack.c.b16 %v135, %v134
    %v149 = vpack.c.b16 %v137, %v136
    %v150 = vpack.c.b16 %v139, %v138
    %v151 = vpack.c.b16 %v141, %v140
    %v152 = vpack.c.b16 %v143, %v142
    %v153 = vpack.c.b16 %v145, %v144
    %162 = vmatprep.subr.bf16.mxu0 0
    %163 = vmatpush1.bf16.msra.mxu0 %v153
    %164 = vmatprep.subr.bf16.mxu0 0
    %165 = vmatpush1.bf16.msra.mxu0 %v152
    %166 = vmatprep.subr.bf16.mxu0 0
    %167 = vmatpush1.bf16.msra.mxu0 %v151
    %168 = vmatprep.subr.bf16.mxu0 0
    %169 = vmatpush1.bf16.msra.mxu0 %v150
    %170 = vmatprep.subr.bf16.mxu0 0
    %171 = vmatpush1.bf16.msra.mxu0 %v149
    %172 = vmatprep.subr.bf16.mxu0 0
    %173 = vmatpush1.bf16.msra.mxu0 %v148
    %174 = vmatprep.subr.bf16.mxu0 0
    %175 = vmatpush1.bf16.msra.mxu0 %v147
    %176 = vmatprep.subr.bf16.mxu0 0
    %177 = vmatpush1.bf16.msra.mxu0 %v146
    %178 = vmatprep.subr.bf16.mxu0 0
    %179 = vmatpush2.bf16.msra.mxu0 0
    %180 = vmatprep.subr.bf16.mxu0 0
    %181 = vmatpush2.bf16.msra.mxu0 0
    %182 = vmatprep.subr.bf16.mxu0 0
    %183 = vmatpush2.bf16.msra.mxu0 0
    %184 = vmatprep.subr.bf16.mxu0 0
    %185 = vmatpush2.bf16.msra.mxu0 0
    %186 = vmatprep.subr.bf16.mxu0 0
    %187 = vmatpush2.bf16.msra.mxu0 0
    %188 = vmatprep.subr.bf16.mxu0 0
    %189 = vmatpush2.bf16.msra.mxu0 0
    %190 = vmatprep.subr.bf16.mxu0 0
    %191 = vmatpush2.bf16.msra.mxu0 0
    %192 = vmatprep.subr.bf16.mxu0 0
    %193 = vmatpush2.bf16.msra.mxu0 0
    %194 = vmatprep.mubr.bf16.mxu0 0
    %195 = vmatmul.mubr.bf16.gmra.mxu0 %v112
    %v196 = vpop.f32.mrf.mxu0
    %v197 = vadd.f32 %v106, %v196
    %v198 = vpop.f32.mrf.mxu0
    %v199 = vpop.f32.mrf.mxu0
    %v200 = vadd.f32 %v106, %v199
    %v201 = vpop.f32.mrf.mxu0
    %202 = vdwg.mxu0
    %v203 = vmax.f32 %v197, 0.0
    %v204 = vmax.f32 %v200, 0.0
    %v205 = vpack.c.bf16 %v204, %v203
    %v206 = vld [vmem:[#allocation7] sm:$0xf]
    %v207 = vld [vmem:[#allocation7 + $0x4] sm:$0xf]
    %v208 = vld [vmem:[#allocation7 + $0x8] sm:$0xf]
    %v209 = vld [vmem:[#allocation7 + $0xc] sm:$0xf]
    %v210 = vld [vmem:[#allocation7 + $0x10] sm:$0xf]
    %v211 = vld [vmem:[#allocation7 + $0x14] sm:$0xf]
    %v212 = vld [vmem:[#allocation7 + $0x18] sm:$0xf]
    %v213 = vld [vmem:[#allocation7 + $0x1c] sm:$0xf]
    %v214 = vld [vmem:[#allocation7 + $0x20] sm:$0xf]
    %v215 = vld [vmem:[#allocation7 + $0x24] sm:$0xf]
    %v216 = vld [vmem:[#allocation7 + $0x28] sm:$0xf]
    %v217 = vld [vmem:[#allocation7 + $0x2c] sm:$0xf]
    %v218 = vld [vmem:[#allocation7 + $0x30] sm:$0xf]
    %v219 = vld [vmem:[#allocation7 + $0x34] sm:$0xf]
    %v220 = vld [vmem:[#allocation7 + $0x38] sm:$0xf]
    %v221 = vld [vmem:[#allocation7 + $0x3c] sm:$0xf]
    %v222 = vld [vmem:[%s4] sm:$0x1]
    %v224 = vlaneseq
    %v225 = vshrl.u32 %v224, 7
    %v226 = vsub.s32 0, %v225
    %v227 = vrot.slane %v222, %v226
    %v245 = vunpack.c.l.b16 %v206
    %v246 = vunpack.c.l.b16 %v207
    %v247 = vunpack.c.l.b16 %v208
    %v248 = vunpack.c.l.b16 %v209
    %v249 = vunpack.c.l.b16 %v210
    %v250 = vunpack.c.l.b16 %v211
    %v251 = vunpack.c.l.b16 %v212
    %v252 = vunpack.c.l.b16 %v213
    %v253 = vunpack.c.l.b16 %v214
    %v254 = vunpack.c.l.b16 %v215
    %v255 = vunpack.c.l.b16 %v216
    %v256 = vunpack.c.l.b16 %v217
    %v257 = vunpack.c.l.b16 %v218
    %v258 = vunpack.c.l.b16 %v219
    %v259 = vunpack.c.l.b16 %v220
    %v260 = vunpack.c.l.b16 %v221
    %v261 = vpack.c.b16 %v246, %v245
    %v262 = vpack.c.b16 %v248, %v247
    %v263 = vpack.c.b16 %v250, %v249
    %v264 = vpack.c.b16 %v252, %v251
    %v265 = vpack.c.b16 %v254, %v253
    %v266 = vpack.c.b16 %v256, %v255
    %v267 = vpack.c.b16 %v258, %v257
    %v268 = vpack.c.b16 %v260, %v259
    %277 = vmatprep.subr.bf16.mxu0 0
    %278 = vmatpush1.bf16.msra.mxu0 %v268
    %279 = vmatprep.subr.bf16.mxu0 0
    %280 = vmatpush1.bf16.msra.mxu0 %v267
    %281 = vmatprep.subr.bf16.mxu0 0
    %282 = vmatpush1.bf16.msra.mxu0 %v266
    %283 = vmatprep.subr.bf16.mxu0 0
    %284 = vmatpush1.bf16.msra.mxu0 %v265
    %285 = vmatprep.subr.bf16.mxu0 0
    %286 = vmatpush1.bf16.msra.mxu0 %v264
    %287 = vmatprep.subr.bf16.mxu0 0
    %288 = vmatpush1.bf16.msra.mxu0 %v263
    %289 = vmatprep.subr.bf16.mxu0 0
    %290 = vmatpush1.bf16.msra.mxu0 %v262
    %291 = vmatprep.subr.bf16.mxu0 0
    %292 = vmatpush1.bf16.msra.mxu0 %v261
    %293 = vmatprep.subr.bf16.mxu0 0
    %294 = vmatpush2.bf16.msra.mxu0 0
    %295 = vmatprep.subr.bf16.mxu0 0
    %296 = vmatpush2.bf16.msra.mxu0 0
    %297 = vmatprep.subr.bf16.mxu0 0
    %298 = vmatpush2.bf16.msra.mxu0 0
    %299 = vmatprep.subr.bf16.mxu0 0
    %300 = vmatpush2.bf16.msra.mxu0 0
    %301 = vmatprep.subr.bf16.mxu0 0
    %302 = vmatpush2.bf16.msra.mxu0 0
    %303 = vmatprep.subr.bf16.mxu0 0
    %304 = vmatpush2.bf16.msra.mxu0 0
    %305 = vmatprep.subr.bf16.mxu0 0
    %306 = vmatpush2.bf16.msra.mxu0 0
    %307 = vmatprep.subr.bf16.mxu0 0
    %308 = vmatpush2.bf16.msra.mxu0 0
    %309 = vmatprep.mubr.bf16.mxu0 0
    %310 = vmatmul.mubr.bf16.gmra.mxu0 %v205
    %v311 = vpop.f32.mrf.mxu0
    %v312 = vadd.f32 %v227, %v311
    %v313 = vpop.f32.mrf.mxu0
    %v314 = vpop.f32.mrf.mxu0
    %v315 = vadd.f32 %v227, %v314
    %v316 = vpop.f32.mrf.mxu0
    %317 = vdwg.mxu0
    %v318 = vmax.f32 %v312, 0.0
    %v319 = vmax.f32 %v315, 0.0
    %v320 = vpack.c.bf16 %v319, %v318
    %v321 = vld [vmem:[#allocation8] sm:$0xf]
    %v322 = vld [vmem:[#allocation8 + $0x4] sm:$0xf]
    %v323 = vld [vmem:[#allocation8 + $0x8] sm:$0xf]
    %v324 = vld [vmem:[#allocation8 + $0xc] sm:$0xf]
    %v325 = vld [vmem:[#allocation8 + $0x10] sm:$0xf]
    %v326 = vld [vmem:[#allocation8 + $0x14] sm:$0xf]
    %v327 = vld [vmem:[#allocation8 + $0x18] sm:$0xf]
    %v328 = vld [vmem:[#allocation8 + $0x1c] sm:$0xf]
    %v329 = vld [vmem:[#allocation8 + $0x20] sm:$0xf]
    %v330 = vld [vmem:[#allocation8 + $0x24] sm:$0xf]
    %v331 = vld [vmem:[#allocation8 + $0x28] sm:$0xf]
    %v332 = vld [vmem:[#allocation8 + $0x2c] sm:$0xf]
    %v333 = vld [vmem:[#allocation8 + $0x30] sm:$0xf]
    %v334 = vld [vmem:[#allocation8 + $0x34] sm:$0xf]
    %v335 = vld [vmem:[#allocation8 + $0x38] sm:$0xf]
    %v336 = vld [vmem:[#allocation8 + $0x3c] sm:$0xf]
    %v337 = vld [vmem:[%s6] sm:$0x1]
    %v339 = vlaneseq
    %v340 = vshrl.u32 %v339, 7
    %v341 = vsub.s32 0, %v340
    %v342 = vrot.slane %v337, %v341
    %v360 = vunpack.c.l.b16 %v321
    %v361 = vunpack.c.l.b16 %v322
    %v362 = vunpack.c.l.b16 %v323
    %v363 = vunpack.c.l.b16 %v324
    %v364 = vunpack.c.l.b16 %v325
    %v365 = vunpack.c.l.b16 %v326
    %v366 = vunpack.c.l.b16 %v327
    %v367 = vunpack.c.l.b16 %v328
    %v368 = vunpack.c.l.b16 %v329
    %v369 = vunpack.c.l.b16 %v330
    %v370 = vunpack.c.l.b16 %v331
    %v371 = vunpack.c.l.b16 %v332
    %v372 = vunpack.c.l.b16 %v333
    %v373 = vunpack.c.l.b16 %v334
    %v374 = vunpack.c.l.b16 %v335
    %v375 = vunpack.c.l.b16 %v336
    %v376 = vpack.c.b16 %v361, %v360
    %v377 = vpack.c.b16 %v363, %v362
    %v378 = vpack.c.b16 %v365, %v364
    %v379 = vpack.c.b16 %v367, %v366
    %v380 = vpack.c.b16 %v369, %v368
    %v381 = vpack.c.b16 %v371, %v370
    %v382 = vpack.c.b16 %v373, %v372
    %v383 = vpack.c.b16 %v375, %v374
    %392 = vmatprep.subr.bf16.mxu0 0
    %393 = vmatpush1.bf16.msra.mxu0 %v383
    %394 = vmatprep.subr.bf16.mxu0 0
    %395 = vmatpush1.bf16.msra.mxu0 %v382
    %396 = vmatprep.subr.bf16.mxu0 0
    %397 = vmatpush1.bf16.msra.mxu0 %v381
    %398 = vmatprep.subr.bf16.mxu0 0
    %399 = vmatpush1.bf16.msra.mxu0 %v380
    %400 = vmatprep.subr.bf16.mxu0 0
    %401 = vmatpush1.bf16.msra.mxu0 %v379
    %402 = vmatprep.subr.bf16.mxu0 0
    %403 = vmatpush1.bf16.msra.mxu0 %v378
    %404 = vmatprep.subr.bf16.mxu0 0
    %405 = vmatpush1.bf16.msra.mxu0 %v377
    %406 = vmatprep.subr.bf16.mxu0 0
    %407 = vmatpush1.bf16.msra.mxu0 %v376
    %408 = vmatprep.subr.bf16.mxu0 0
    %409 = vmatpush2.bf16.msra.mxu0 0
    %410 = vmatprep.subr.bf16.mxu0 0
    %411 = vmatpush2.bf16.msra.mxu0 0
    %412 = vmatprep.subr.bf16.mxu0 0
    %413 = vmatpush2.bf16.msra.mxu0 0
    %414 = vmatprep.subr.bf16.mxu0 0
    %415 = vmatpush2.bf16.msra.mxu0 0
    %416 = vmatprep.subr.bf16.mxu0 0
    %417 = vmatpush2.bf16.msra.mxu0 0
    %418 = vmatprep.subr.bf16.mxu0 0
    %419 = vmatpush2.bf16.msra.mxu0 0
    %420 = vmatprep.subr.bf16.mxu0 0
    %421 = vmatpush2.bf16.msra.mxu0 0
    %422 = vmatprep.subr.bf16.mxu0 0
    %423 = vmatpush2.bf16.msra.mxu0 0
    %424 = vmatprep.mubr.bf16.mxu0 0
    %425 = vmatmul.mubr.bf16.gmra.mxu0 %v320
    %v426 = vpop.f32.mrf.mxu0
    %v427 = vadd.f32 %v342, %v426
    %v428 = vpop.f32.mrf.mxu0
    %v429 = vpop.f32.mrf.mxu0
    %v430 = vadd.f32 %v342, %v429
    %v431 = vpop.f32.mrf.mxu0
    %432 = vdwg.mxu0
    %433 = vst [vmem:[#allocation10] sm:$0xff] %v427
    %434 = vst [vmem:[#allocation10 + $0x8] sm:$0xff] %v430
    // Predicated region
    $region46: #{tpu_custom_call.1} parent=1 // pred_check
      _
    $region47: #{tpu_custom_call.1} parent=1 // pred_check_branch
      %436 = sbr.rel (0) target = $region49
    $region48: #{tpu_custom_call.1} parent=1 // pred_region
      %s438 = ssub.s32 256, 256
      %439 = vsyncadd [#allocation4], %s438
      %s440 = sshll.u32 [#allocation10], 4
      %s441 = int_to_ptr.vmem [resolvable:$true] %s440
      %446 = dma.vmem_to_hbm [thread:$0]  %s441, 256, %s7, [#allocation4], 128, 128, 8
    $region49: #{tpu_custom_call.1} parent=1 // pred_fallthru
      _
    // Predicated region
    $region50: #{tpu_custom_call.1} parent=1 // pred_check
      _
    $region51: #{tpu_custom_call.1} parent=1 // pred_check_branch
      %448 = sbr.rel (0) target = $region53
    $region52: #{tpu_custom_call.1} parent=1 // pred_region
      %449 = dma.done [#allocation4], 256
    $region53: #{tpu_custom_call.1} parent=1 // pred_fallthru
      _
    %450 = vsyncpa [#allocation3], 1
    %451 = vsyncpa [#allocation6], 1
    %452 = vsyncpa [#allocation9], 1
    %453 = vsyncpa [#allocation4], 1

</llo_original>
